<compile_context>
chip_gen: v5e
topology: v5e:2x2
jax: 0.10.0
libtpu: 0.0.40
codegen_flags: <defaults>
</compile_context>

<pallas_src>
import functools

import jax
import jax.numpy as jnp
from jax.experimental import pallas as pl
from jax.experimental.pallas import tpu as pltpu


def _softplus(x):
    # torch.nn.functional.softplus(x, beta=1, threshold=20)
    return jnp.where(x > 20.0, x, jnp.log1p(jnp.exp(jnp.minimum(x, 20.0))))


def _round_up(n, m):
    return ((n + m - 1) // m) * m


def fused_bayesian_nn_kernel(x_ref, *refs, layer_shapes):
    """Whole-network forward: activations stay in vregs, KL accumulated in VMEM.

    refs layout: [theta_mean_0, theta_spread_0, eps_0, ..., out_ref, kl_ref,
                  kl_acc_ref(scratch)].
    Each theta_* / eps_i has shape (In_i + 1, Out_i): the last row is the bias.
    """
    n_layers = len(layer_shapes)
    param_refs = refs[: 3 * n_layers]
    out_ref, kl_ref, kl_acc_ref = refs[3 * n_layers:]

    # Deferred-KL accumulator: one sublane partial-sum per layer lands here,
    # a single cross-lane reduce happens at the end.
    kl_acc_ref[...] = jnp.zeros_like(kl_acc_ref)

    h = x_ref[...]                                      # (B, in_units), f32

    for i, (in_u, out_u) in enumerate(layer_shapes):    # static unroll
        mean = param_refs[3 * i + 0][...]               # (In+1, Out)
        spread = param_refs[3 * i + 1][...]             # (In+1, Out)
        eps = param_refs[3 * i + 2][...]                # (In+1, Out)

        std = 1e-06 + _softplus(spread)
        theta = mean + std * eps                        # sampled [weights; bias]

        w = theta[:in_u, :]                             # (In, Out)
        b = theta[in_u:in_u + 1, :]                     # (1, Out) bias row

        # bf16 MXU inputs, f32 accumulation.
        h = jnp.dot(h.astype(jnp.bfloat16), w.astype(jnp.bfloat16),
                    preferred_element_type=jnp.float32) + b
        if i < n_layers - 1:                            # hidden_activation = ReLU
            h = jnp.maximum(h, 0.0)

        # kl += lqw - lpw with an N(0,1) prior: the -0.5*log(2*pi) terms cancel
        # and (theta - mean)/std == eps, so a single fused expression per layer.
        contrib = 0.5 * theta * theta - 0.5 * eps * eps - jnp.log(std)
        part = jnp.sum(contrib, axis=0, keepdims=True)  # sublane reduce, (1, Out)
        kl_acc_ref[:, :out_u] = kl_acc_ref[:, :out_u] + part

    # Single lane-packed output write; mean/variance split happens in wrapper.
    out_ref[...] = h
    # Exactly one cross-lane reduction for the KL scalar; scalar goes to SMEM.
    kl_ref[0] = jnp.sum(kl_acc_ref[...])


def make_bayesian_nn(layer_shapes, output_units):
    """Builds the fused forward pass for a fixed architecture.

    layer_shapes: list of (in_units, out_units) per BayesianLayer; the last
    layer must have out_units == 2 * output_units."""
    n_layers = len(layer_shapes)
    assert layer_shapes[-1][1] == 2 * output_units
    acc_width = _round_up(max(o for _, o in layer_shapes), 128)

    vmem = pl.BlockSpec(memory_space=pltpu.MemorySpace.VMEM)
    smem = pl.BlockSpec(memory_space=pltpu.MemorySpace.SMEM)
    kernel = functools.partial(fused_bayesian_nn_kernel,
                               layer_shapes=tuple(layer_shapes))

    def forward(x, packed_params, rng_key):
        batch = x.shape[0]

        # eps ~ N(0,1) drawn per call (matches torch .normal_() per forward);
        # generated host-side so the kernel carries zero RNG transcendentals.
        eps_keys = jax.random.split(rng_key, n_layers)
        flat_inputs = []
        for (theta_mean, theta_spread), (in_u, out_u), k in zip(
                packed_params, layer_shapes, eps_keys):
            eps = jax.random.normal(k, (in_u + 1, out_u), jnp.float32)
            flat_inputs.extend([theta_mean, theta_spread, eps])

        # Fully-resident design: every layer's params + eps + x + output sit in
        # VMEM simultaneously (no grid, no tiling). Document the ceiling
        # explicitly -- relevant for v7x (64 MiB physical VMEM). For large
        # layer_units, switch to streaming params (pl.ANY + emit_pipeline).
        param_elems = sum(3 * (in_u + 1) * out_u for in_u, out_u in layer_shapes)
        io_elems = batch * (layer_shapes[0][0] + 2 * output_units) + acc_width
        vmem_limit = int(min(48 * 1024 * 1024,
                             max(4 * 1024 * 1024, 8 * 4 * (param_elems + io_elems))))

        out, kl = pl.pallas_call(
            kernel,
            out_shape=(
                jax.ShapeDtypeStruct((batch, 2 * output_units), jnp.float32),
                jax.ShapeDtypeStruct((1,), jnp.float32),
            ),
            in_specs=[vmem] * (1 + 3 * n_layers),
            out_specs=(vmem, smem),
            scratch_shapes=[pltpu.VMEM((1, acc_width), jnp.float32)],
            compiler_params=pltpu.CompilerParams(vmem_limit_bytes=vmem_limit),
        )(x, *flat_inputs)

        mean = out[:, :output_units]
        variance = _softplus(out[:, output_units:]) + 1e-06   # output_activation
        return mean, variance, kl[0]

    return jax.jit(forward)


def init_layer_params(key, in_units, out_units):
    """Matches the torch uniform init ranges; bias row packed into the weight
    tensors so the kernel samples / softpluses / KL-reduces one (In+1, Out)
    tensor per layer."""
    k0, k1, k2, k3 = jax.random.split(key, 4)
    w_mean = jax.random.uniform(k0, (in_units, out_units), jnp.float32, -0.1, 0.1)
    w_spread = jax.random.uniform(k1, (in_units, out_units), jnp.float32, -3.0, -2.0)
    b_mean = jax.random.uniform(k2, (1, out_units), jnp.float32, -0.1, 0.1)
    b_spread = jax.random.uniform(k3, (1, out_units), jnp.float32, -3.0, -2.0)
    theta_mean = jnp.concatenate([w_mean, b_mean], axis=0)      # (In+1, Out)
    theta_spread = jnp.concatenate([w_spread, b_spread], axis=0)
    return (theta_mean, theta_spread)


if __name__ == "__main__":
    # small synthetic NetConfig: input_units=16, layer_units=[32, 32], output_units=4
    batch = 8
    input_units = 16
    layer_units = [32, 32]
    output_units = 4

    key = jax.random.PRNGKey(0)
    k_x, k_params, k_eps = jax.random.split(key, 3)

    sizes = [input_units] + layer_units + [2 * output_units]
    layer_shapes = list(zip(sizes[:-1], sizes[1:]))
    param_keys = jax.random.split(k_params, len(layer_shapes))
    layer_params = [
        init_layer_params(pk, in_u, out_u)
        for pk, (in_u, out_u) in zip(param_keys, layer_shapes)
    ]

    x = jax.random.normal(k_x, (batch, input_units), jnp.float32)

    forward = make_bayesian_nn(layer_shapes, output_units)
    mean, variance, kl = forward(x, layer_params, k_eps)
    jax.block_until_ready((mean, variance, kl))

    assert mean.shape == (batch, output_units)
    assert variance.shape == (batch, output_units)
    assert bool(jnp.all(variance > 0.0))
    assert kl.shape == ()
    assert bool(jnp.isfinite(kl))
    assert bool(jnp.all(jnp.isfinite(mean)))
    assert bool(jnp.all(jnp.isfinite(variance)))

    print("KERNEL_OK")
</pallas_src>

<mosaic_0001>
module attributes {stable_mosaic.version = 11 : i64} {
  func.func @fused_bayesian_nn_kernel(%arg0: memref<8x16xf32, #tpu.memory_space<vmem>>, %arg1: memref<17x32xf32, #tpu.memory_space<vmem>>, %arg2: memref<17x32xf32, #tpu.memory_space<vmem>>, %arg3: memref<17x32xf32, #tpu.memory_space<vmem>>, %arg4: memref<33x32xf32, #tpu.memory_space<vmem>>, %arg5: memref<33x32xf32, #tpu.memory_space<vmem>>, %arg6: memref<33x32xf32, #tpu.memory_space<vmem>>, %arg7: memref<33x8xf32, #tpu.memory_space<vmem>>, %arg8: memref<33x8xf32, #tpu.memory_space<vmem>>, %arg9: memref<33x8xf32, #tpu.memory_space<vmem>>, %arg10: memref<8x8xf32, #tpu.memory_space<vmem>>, %arg11: memref<1xf32, #tpu.memory_space<smem>>, %arg12: memref<1x128xf32, #tpu.memory_space<vmem>>) attributes {dimension_semantics = [], scalar_prefetch = 0 : i64, scratch_operands = 1 : i64, tpu.core_type = #tpu.core_type<tc>} {
    %cst = arith.constant 0.000000e+00 : f32
    %0 = vector.broadcast %cst : f32 to vector<1x128xf32>
    %c0 = arith.constant 0 : index
    %c0_0 = arith.constant 0 : index
    %1 = vector.load %arg12[%c0, %c0_0] : memref<1x128xf32, #tpu.memory_space<vmem>>, vector<1x128xf32>
    tpu.vector_store %arg12[%c0, %c0_0], %0 {strides = array<i32>} : memref<1x128xf32, #tpu.memory_space<vmem>>, vector<1x128xf32>,
    %c0_1 = arith.constant 0 : index
    %c0_2 = arith.constant 0 : index
    %2 = vector.load %arg0[%c0_1, %c0_2] : memref<8x16xf32, #tpu.memory_space<vmem>>, vector<8x16xf32>
    %c0_3 = arith.constant 0 : index
    %c0_4 = arith.constant 0 : index
    %3 = vector.load %arg1[%c0_3, %c0_4] : memref<17x32xf32, #tpu.memory_space<vmem>>, vector<17x32xf32>
    %c0_5 = arith.constant 0 : index
    %c0_6 = arith.constant 0 : index
    %4 = vector.load %arg2[%c0_5, %c0_6] : memref<17x32xf32, #tpu.memory_space<vmem>>, vector<17x32xf32>
    %c0_7 = arith.constant 0 : index
    %c0_8 = arith.constant 0 : index
    %5 = vector.load %arg3[%c0_7, %c0_8] : memref<17x32xf32, #tpu.memory_space<vmem>>, vector<17x32xf32>
    %cst_9 = arith.constant 2.000000e+01 : f32
    %6 = vector.broadcast %cst_9 : f32 to vector<17x32xf32>
    %7 = arith.cmpf ogt, %4, %6 : vector<17x32xf32>
    %cst_10 = arith.constant 2.000000e+01 : f32
    %8 = vector.broadcast %cst_10 : f32 to vector<17x32xf32>
    %9 = arith.minimumf %4, %8 : vector<17x32xf32>
    %10 = math.exp %9 : vector<17x32xf32>
    %11 = math.log1p %10 : vector<17x32xf32>
    %12 = arith.select %7, %4, %11 : vector<17x32xi1>, vector<17x32xf32>
    %cst_11 = arith.constant 9.99999997E-7 : f32
    %13 = vector.broadcast %cst_11 : f32 to vector<17x32xf32>
    %14 = arith.addf %13, %12 : vector<17x32xf32>
    %15 = arith.mulf %14, %5 : vector<17x32xf32>
    %16 = arith.addf %3, %15 : vector<17x32xf32>
    %17 = vector.extract_strided_slice %16 {offsets = [0, 0], sizes = [16, 32], strides = [1, 1]} : vector<17x32xf32> to vector<16x32xf32>
    %18 = vector.extract_strided_slice %16 {offsets = [16, 0], sizes = [1, 32], strides = [1, 1]} : vector<17x32xf32> to vector<1x32xf32>
    %19 = arith.truncf %2 : vector<8x16xf32> to vector<8x16xbf16>
    %20 = arith.truncf %17 : vector<16x32xf32> to vector<16x32xbf16>
    %cst_12 = arith.constant dense<0.000000e+00> : vector<8x32xf32>
    %21 = tpu.matmul %19, %20, %cst_12 {dimension_numbers = #tpu.dot_dimension_numbers<[1], [0], [0], [1], [0, 0, 1, 1], [], []>} : vector<8x16xbf16>, vector<16x32xbf16>, vector<8x32xf32> -> vector<8x32xf32>
    %22 = vector.broadcast %18 : vector<1x32xf32> to vector<8x32xf32>
    %23 = arith.addf %21, %22 : vector<8x32xf32>
    %cst_13 = arith.constant 0.000000e+00 : f32
    %24 = vector.broadcast %cst_13 : f32 to vector<8x32xf32>
    %25 = arith.maximumf %23, %24 : vector<8x32xf32>
    %cst_14 = arith.constant 5.000000e-01 : f32
    %26 = vector.broadcast %cst_14 : f32 to vector<17x32xf32>
    %27 = arith.mulf %26, %16 : vector<17x32xf32>
    %28 = arith.mulf %27, %16 : vector<17x32xf32>
    %cst_15 = arith.constant 5.000000e-01 : f32
    %29 = vector.broadcast %cst_15 : f32 to vector<17x32xf32>
    %30 = arith.mulf %29, %5 : vector<17x32xf32>
    %31 = arith.mulf %30, %5 : vector<17x32xf32>
    %32 = arith.subf %28, %31 : vector<17x32xf32>
    %33 = math.log %14 : vector<17x32xf32>
    %34 = arith.subf %32, %33 : vector<17x32xf32>
    %cst_16 = arith.constant dense<0.000000e+00> : vector<32xf32>
    %35 = vector.multi_reduction <add>, %34, %cst_16 [0] : vector<17x32xf32> to vector<32xf32>
    %36 = vector.shape_cast %35 : vector<32xf32> to vector<1x32xf32>
    %c0_17 = arith.constant 0 : index
    %c0_18 = arith.constant 0 : index
    %37 = vector.load %arg12[%c0_17, %c0_18] : memref<1x128xf32, #tpu.memory_space<vmem>>, vector<1x32xf32>
    %38 = arith.addf %37, %36 : vector<1x32xf32>
    %c0_19 = arith.constant 0 : index
    %c0_20 = arith.constant 0 : index
    %39 = vector.load %arg12[%c0_19, %c0_20] : memref<1x128xf32, #tpu.memory_space<vmem>>, vector<1x32xf32>
    tpu.vector_store %arg12[%c0_19, %c0_20], %38 {strides = array<i32>} : memref<1x128xf32, #tpu.memory_space<vmem>>, vector<1x32xf32>,
    %c0_21 = arith.constant 0 : index
    %c0_22 = arith.constant 0 : index
    %40 = vector.load %arg4[%c0_21, %c0_22] : memref<33x32xf32, #tpu.memory_space<vmem>>, vector<33x32xf32>
    %c0_23 = arith.constant 0 : index
    %c0_24 = arith.constant 0 : index
    %41 = vector.load %arg5[%c0_23, %c0_24] : memref<33x32xf32, #tpu.memory_space<vmem>>, vector<33x32xf32>
    %c0_25 = arith.constant 0 : index
    %c0_26 = arith.constant 0 : index
    %42 = vector.load %arg6[%c0_25, %c0_26] : memref<33x32xf32, #tpu.memory_space<vmem>>, vector<33x32xf32>
    %cst_27 = arith.constant 2.000000e+01 : f32
    %43 = vector.broadcast %cst_27 : f32 to vector<33x32xf32>
    %44 = arith.cmpf ogt, %41, %43 : vector<33x32xf32>
    %cst_28 = arith.constant 2.000000e+01 : f32
    %45 = vector.broadcast %cst_28 : f32 to vector<33x32xf32>
    %46 = arith.minimumf %41, %45 : vector<33x32xf32>
    %47 = math.exp %46 : vector<33x32xf32>
    %48 = math.log1p %47 : vector<33x32xf32>
    %49 = arith.select %44, %41, %48 : vector<33x32xi1>, vector<33x32xf32>
    %cst_29 = arith.constant 9.99999997E-7 : f32
    %50 = vector.broadcast %cst_29 : f32 to vector<33x32xf32>
    %51 = arith.addf %50, %49 : vector<33x32xf32>
    %52 = arith.mulf %51, %42 : vector<33x32xf32>
    %53 = arith.addf %40, %52 : vector<33x32xf32>
    %54 = vector.extract_strided_slice %53 {offsets = [0, 0], sizes = [32, 32], strides = [1, 1]} : vector<33x32xf32> to vector<32x32xf32>
    %55 = vector.extract_strided_slice %53 {offsets = [32, 0], sizes = [1, 32], strides = [1, 1]} : vector<33x32xf32> to vector<1x32xf32>
    %56 = arith.truncf %25 : vector<8x32xf32> to vector<8x32xbf16>
    %57 = arith.truncf %54 : vector<32x32xf32> to vector<32x32xbf16>
    %cst_30 = arith.constant dense<0.000000e+00> : vector<8x32xf32>
    %58 = tpu.matmul %56, %57, %cst_30 {dimension_numbers = #tpu.dot_dimension_numbers<[1], [0], [0], [1], [0, 0, 1, 1], [], []>} : vector<8x32xbf16>, vector<32x32xbf16>, vector<8x32xf32> -> vector<8x32xf32>
    %59 = vector.broadcast %55 : vector<1x32xf32> to vector<8x32xf32>
    %60 = arith.addf %58, %59 : vector<8x32xf32>
    %cst_31 = arith.constant 0.000000e+00 : f32
    %61 = vector.broadcast %cst_31 : f32 to vector<8x32xf32>
    %62 = arith.maximumf %60, %61 : vector<8x32xf32>
    %cst_32 = arith.constant 5.000000e-01 : f32
    %63 = vector.broadcast %cst_32 : f32 to vector<33x32xf32>
    %64 = arith.mulf %63, %53 : vector<33x32xf32>
    %65 = arith.mulf %64, %53 : vector<33x32xf32>
    %cst_33 = arith.constant 5.000000e-01 : f32
    %66 = vector.broadcast %cst_33 : f32 to vector<33x32xf32>
    %67 = arith.mulf %66, %42 : vector<33x32xf32>
    %68 = arith.mulf %67, %42 : vector<33x32xf32>
    %69 = arith.subf %65, %68 : vector<33x32xf32>
    %70 = math.log %51 : vector<33x32xf32>
    %71 = arith.subf %69, %70 : vector<33x32xf32>
    %cst_34 = arith.constant dense<0.000000e+00> : vector<32xf32>
    %72 = vector.multi_reduction <add>, %71, %cst_34 [0] : vector<33x32xf32> to vector<32xf32>
    %73 = vector.shape_cast %72 : vector<32xf32> to vector<1x32xf32>
    %c0_35 = arith.constant 0 : index
    %c0_36 = arith.constant 0 : index
    %74 = vector.load %arg12[%c0_35, %c0_36] : memref<1x128xf32, #tpu.memory_space<vmem>>, vector<1x32xf32>
    %75 = arith.addf %74, %73 : vector<1x32xf32>
    %c0_37 = arith.constant 0 : index
    %c0_38 = arith.constant 0 : index
    %76 = vector.load %arg12[%c0_37, %c0_38] : memref<1x128xf32, #tpu.memory_space<vmem>>, vector<1x32xf32>
    tpu.vector_store %arg12[%c0_37, %c0_38], %75 {strides = array<i32>} : memref<1x128xf32, #tpu.memory_space<vmem>>, vector<1x32xf32>,
    %c0_39 = arith.constant 0 : index
    %c0_40 = arith.constant 0 : index
    %77 = vector.load %arg7[%c0_39, %c0_40] : memref<33x8xf32, #tpu.memory_space<vmem>>, vector<33x8xf32>
    %c0_41 = arith.constant 0 : index
    %c0_42 = arith.constant 0 : index
    %78 = vector.load %arg8[%c0_41, %c0_42] : memref<33x8xf32, #tpu.memory_space<vmem>>, vector<33x8xf32>
    %c0_43 = arith.constant 0 : index
    %c0_44 = arith.constant 0 : index
    %79 = vector.load %arg9[%c0_43, %c0_44] : memref<33x8xf32, #tpu.memory_space<vmem>>, vector<33x8xf32>
    %cst_45 = arith.constant 2.000000e+01 : f32
    %80 = vector.broadcast %cst_45 : f32 to vector<33x8xf32>
    %81 = arith.cmpf ogt, %78, %80 : vector<33x8xf32>
    %cst_46 = arith.constant 2.000000e+01 : f32
    %82 = vector.broadcast %cst_46 : f32 to vector<33x8xf32>
    %83 = arith.minimumf %78, %82 : vector<33x8xf32>
    %84 = math.exp %83 : vector<33x8xf32>
    %85 = math.log1p %84 : vector<33x8xf32>
    %86 = arith.select %81, %78, %85 : vector<33x8xi1>, vector<33x8xf32>
    %cst_47 = arith.constant 9.99999997E-7 : f32
    %87 = vector.broadcast %cst_47 : f32 to vector<33x8xf32>
    %88 = arith.addf %87, %86 : vector<33x8xf32>
    %89 = arith.mulf %88, %79 : vector<33x8xf32>
    %90 = arith.addf %77, %89 : vector<33x8xf32>
    %91 = vector.extract_strided_slice %90 {offsets = [0, 0], sizes = [32, 8], strides = [1, 1]} : vector<33x8xf32> to vector<32x8xf32>
    %92 = vector.extract_strided_slice %90 {offsets = [32, 0], sizes = [1, 8], strides = [1, 1]} : vector<33x8xf32> to vector<1x8xf32>
    %93 = arith.truncf %62 : vector<8x32xf32> to vector<8x32xbf16>
    %94 = arith.truncf %91 : vector<32x8xf32> to vector<32x8xbf16>
    %cst_48 = arith.constant dense<0.000000e+00> : vector<8x8xf32>
    %95 = tpu.matmul %93, %94, %cst_48 {dimension_numbers = #tpu.dot_dimension_numbers<[1], [0], [0], [1], [0, 0, 1, 1], [], []>} : vector<8x32xbf16>, vector<32x8xbf16>, vector<8x8xf32> -> vector<8x8xf32>
    %96 = vector.broadcast %92 : vector<1x8xf32> to vector<8x8xf32>
    %97 = arith.addf %95, %96 : vector<8x8xf32>
    %cst_49 = arith.constant 5.000000e-01 : f32
    %98 = vector.broadcast %cst_49 : f32 to vector<33x8xf32>
    %99 = arith.mulf %98, %90 : vector<33x8xf32>
    %100 = arith.mulf %99, %90 : vector<33x8xf32>
    %cst_50 = arith.constant 5.000000e-01 : f32
    %101 = vector.broadcast %cst_50 : f32 to vector<33x8xf32>
    %102 = arith.mulf %101, %79 : vector<33x8xf32>
    %103 = arith.mulf %102, %79 : vector<33x8xf32>
    %104 = arith.subf %100, %103 : vector<33x8xf32>
    %105 = math.log %88 : vector<33x8xf32>
    %106 = arith.subf %104, %105 : vector<33x8xf32>
    %cst_51 = arith.constant dense<0.000000e+00> : vector<8xf32>
    %107 = vector.multi_reduction <add>, %106, %cst_51 [0] : vector<33x8xf32> to vector<8xf32>
    %108 = vector.shape_cast %107 : vector<8xf32> to vector<1x8xf32>
    %c0_52 = arith.constant 0 : index
    %c0_53 = arith.constant 0 : index
    %109 = vector.load %arg12[%c0_52, %c0_53] : memref<1x128xf32, #tpu.memory_space<vmem>>, vector<1x8xf32>
    %110 = arith.addf %109, %108 : vector<1x8xf32>
    %c0_54 = arith.constant 0 : index
    %c0_55 = arith.constant 0 : index
    %111 = vector.load %arg12[%c0_54, %c0_55] : memref<1x128xf32, #tpu.memory_space<vmem>>, vector<1x8xf32>
    tpu.vector_store %arg12[%c0_54, %c0_55], %110 {strides = array<i32>} : memref<1x128xf32, #tpu.memory_space<vmem>>, vector<1x8xf32>,
    %c0_56 = arith.constant 0 : index
    %c0_57 = arith.constant 0 : index
    %112 = vector.load %arg10[%c0_56, %c0_57] : memref<8x8xf32, #tpu.memory_space<vmem>>, vector<8x8xf32>
    tpu.vector_store %arg10[%c0_56, %c0_57], %97 {strides = array<i32>} : memref<8x8xf32, #tpu.memory_space<vmem>>, vector<8x8xf32>,
    %c0_58 = arith.constant 0 : index
    %c0_59 = arith.constant 0 : index
    %113 = vector.load %arg12[%c0_58, %c0_59] : memref<1x128xf32, #tpu.memory_space<vmem>>, vector<1x128xf32>
    %114 = vector.shape_cast %113 : vector<1x128xf32> to vector<1x1x128xf32>
    %cst_60 = arith.constant dense<0.000000e+00> : vector<1xf32>
    %115 = vector.multi_reduction <add>, %114, %cst_60 [1, 2] : vector<1x1x128xf32> to vector<1xf32>
    %116 = vector.shape_cast %115 : vector<1xf32> to vector<1x1x1xf32>
    %117 = vector.extract %116[0, 0, 0] : f32 from vector<1x1x1xf32>
    %c0_61 = arith.constant 0 : index
    %118 = memref.load %arg11[%c0_61] : memref<1xf32, #tpu.memory_space<smem>>
    memref.store %117, %arg11[%c0_61] : memref<1xf32, #tpu.memory_space<smem>>
    return
  }
}

</mosaic_0001>

<llo_original>
// kernel: forward.1
$region0: #{forward.1}
  #allocation0 [shape = 'u32[]', space=smem, size = 0x4, offset = 0x4, fixed_abs, tag = 'smem constant byte address 0x4 - core index']
  #allocation1 [shape = 'u32[72,128]{1,0:T(1,128)}', space=vmem, size = 0x9000, scoped, tag = 'internal scratch']
  #allocation2 [shape = 'f32[1,128]{1,0:T(1,128)}', space=vmem, size = 0x200, scoped, tag = 'scratch operand']
  %s0 = inlined_call_operand.vmem [shape: f32[8,16], index: 0, kind: input, shape index: {}]
  %s1 = inlined_call_operand.vmem [shape: f32[17,32], index: 1, kind: input, shape index: {}]
  %s2 = inlined_call_operand.vmem [shape: f32[17,32], index: 2, kind: input, shape index: {}]
  %s3 = inlined_call_operand.vmem [shape: f32[17,32], index: 3, kind: input, shape index: {}]
  %s4 = inlined_call_operand.vmem [shape: f32[33,32], index: 4, kind: input, shape index: {}]
  %s5 = inlined_call_operand.vmem [shape: f32[33,32], index: 5, kind: input, shape index: {}]
  %s6 = inlined_call_operand.vmem [shape: f32[33,32], index: 6, kind: input, shape index: {}]
  %s7 = inlined_call_operand.vmem [shape: f32[33,8], index: 7, kind: input, shape index: {}]
  %s8 = inlined_call_operand.vmem [shape: f32[33,8], index: 8, kind: input, shape index: {}]
  %s9 = inlined_call_operand.vmem [shape: f32[33,8], index: 9, kind: input, shape index: {}]
  %s10 = inlined_call_operand.vmem [shape: f32[8,8], index: 10, kind: output, shape index: {0}]
  %s11 = inlined_call_operand.hbm [shape: f32[1], index: 11, kind: output, shape index: {1}]
  %12 = xla_tuple %s10, %s11
  %s13 = sld [smem:[#allocation0]]
  $region58: #{forward.1} parent=0
    _
  %s15 = ssub.s32 1, %s13
  %s16 = scalar_select 0, %s15, %s13
  $region1: #{forward.1} parent=0
    #allocation3 [shape = 'u8[512]{0}', space=smem, size = 0x200, scoped, tag = 'output window, operand 1, single buffered']
    #allocation4 [shape = 's32[1]{0}', space=sflag, size = 0x4, scoped, tag = 'scoped memory for forward.1']
    %17 = vsyncpa [#allocation4], 0
    // Predicated region
    $region2: #{forward.1} parent=1 // pred_check
      _
    $region3: #{forward.1} parent=1 // pred_check_branch
      %19 = sbr.rel (0) target = $region5
    $region4: #{forward.1} parent=1 // pred_region
      _
    $region5: #{forward.1} parent=1 // pred_fallthru
      _
    // Predicated region
    $region6: #{forward.1} parent=1 // pred_check
      _
    $region7: #{forward.1} parent=1 // pred_check_branch
      %21 = sbr.rel (0) target = $region9
    $region8: #{forward.1} parent=1 // pred_region
      _
    $region9: #{forward.1} parent=1 // pred_fallthru
      _
    // Predicated region
    $region10: #{forward.1} parent=1 // pred_check
      _
    $region11: #{forward.1} parent=1 // pred_check_branch
      %23 = sbr.rel (0) target = $region13
    $region12: #{forward.1} parent=1 // pred_region
      _
    $region13: #{forward.1} parent=1 // pred_fallthru
      _
    // Predicated region
    $region14: #{forward.1} parent=1 // pred_check
      _
    $region15: #{forward.1} parent=1 // pred_check_branch
      %25 = sbr.rel (0) target = $region17
    $region16: #{forward.1} parent=1 // pred_region
      _
    $region17: #{forward.1} parent=1 // pred_fallthru
      _
    // Predicated region
    $region18: #{forward.1} parent=1 // pred_check
      _
    $region19: #{forward.1} parent=1 // pred_check_branch
      %27 = sbr.rel (0) target = $region21
    $region20: #{forward.1} parent=1 // pred_region
      _
    $region21: #{forward.1} parent=1 // pred_fallthru
      _
    // Predicated region
    $region22: #{forward.1} parent=1 // pred_check
      _
    $region23: #{forward.1} parent=1 // pred_check_branch
      %29 = sbr.rel (0) target = $region25
    $region24: #{forward.1} parent=1 // pred_region
      _
    $region25: #{forward.1} parent=1 // pred_fallthru
      _
    // Predicated region
    $region26: #{forward.1} parent=1 // pred_check
      _
    $region27: #{forward.1} parent=1 // pred_check_branch
      %31 = sbr.rel (0) target = $region29
    $region28: #{forward.1} parent=1 // pred_region
      _
    $region29: #{forward.1} parent=1 // pred_fallthru
      _
    // Predicated region
    $region30: #{forward.1} parent=1 // pred_check
      _
    $region31: #{forward.1} parent=1 // pred_check_branch
      %33 = sbr.rel (0) target = $region33
    $region32: #{forward.1} parent=1 // pred_region
      _
    $region33: #{forward.1} parent=1 // pred_fallthru
      _
    // Predicated region
    $region34: #{forward.1} parent=1 // pred_check
      _
    $region35: #{forward.1} parent=1 // pred_check_branch
      %35 = sbr.rel (0) target = $region37
    $region36: #{forward.1} parent=1 // pred_region
      _
    $region37: #{forward.1} parent=1 // pred_fallthru
      _
    // Predicated region
    $region38: #{forward.1} parent=1 // pred_check
      _
    $region39: #{forward.1} parent=1 // pred_check_branch
      %37 = sbr.rel (0) target = $region41
    $region40: #{forward.1} parent=1 // pred_region
      _
    $region41: #{forward.1} parent=1 // pred_fallthru
      _
    %39 = vst [vmem:[#allocation2] sm:$0x1] 0.0
    %v40 = vld [vmem:[%s0] sm:$0xff]
    %v41 = vld [vmem:[%s1] sm:$0xff]
    %v42 = vld [vmem:[%s1 + $0x8] sm:$0xff]
    %v43 = vld [vmem:[%s1 + $0x10] sm:$0x1]
    %v44 = vld [vmem:[%s2] sm:$0xff]
    %v45 = vld [vmem:[%s2 + $0x8] sm:$0xff]
    %v46 = vld [vmem:[%s2 + $0x10] sm:$0x1]
    %v47 = vld [vmem:[%s3] sm:$0xff]
    %v48 = vld [vmem:[%s3 + $0x8] sm:$0xff]
    %v49 = vld [vmem:[%s3 + $0x10] sm:$0x1]
    %vm50 = vcmp.gt.f32.partialorder %v44, 20.0
    %vm51 = vcmp.gt.f32.partialorder %v45, 20.0
    %vm52 = vcmp.gt.f32.partialorder %v46, 20.0
    %v53 = vmin.f32 %v44, 20.0
    %v54 = vmin.f32 %v45, 20.0
    %v55 = vmin.f32 %v46, 20.0
    %v56 = vmul.f32 %v53, 1.442695
    %v57 = vpow.pop %v56
    %v58 = vmul.f32 %v54, 1.442695
    %v59 = vpow.pop %v58
    %v60 = vmul.f32 %v55, 1.442695
    %v61 = vpow.pop %v60
    %v62 = vadd.f32 %v57, 1.0
    %v63 = vlog2.pop %v62
    %v64 = vmul.f32 %v63, 0.6931472
    %v65 = vmul.f32 -0.5, %v57
    %v66 = vadd.f32 %v65, 1.0
    %v67 = vmul.f32 %v66, %v57
    %v68 = vand.u32 2147483647, %v57
    %vm69 = vcmp.lt.f32.partialorder %v68, 0.0004427343
    %v70 = vsel %vm69, %v67, %v64
    %v71 = vadd.f32 %v59, 1.0
    %v72 = vlog2.pop %v71
    %v73 = vmul.f32 %v72, 0.6931472
    %v74 = vmul.f32 -0.5, %v59
    %v75 = vadd.f32 %v74, 1.0
    %v76 = vmul.f32 %v75, %v59
    %v77 = vand.u32 2147483647, %v59
    %vm78 = vcmp.lt.f32.partialorder %v77, 0.0004427343
    %v79 = vsel %vm78, %v76, %v73
    %v80 = vadd.f32 %v61, 1.0
    %v81 = vlog2.pop %v80
    %v82 = vmul.f32 %v81, 0.6931472
    %v83 = vmul.f32 -0.5, %v61
    %v84 = vadd.f32 %v83, 1.0
    %v85 = vmul.f32 %v84, %v61
    %v86 = vand.u32 2147483647, %v61
    %vm87 = vcmp.lt.f32.partialorder %v86, 0.0004427343
    %v88 = vsel %vm87, %v85, %v82
    %v89 = vsel %vm50, %v44, %v70
    %v90 = vsel %vm51, %v45, %v79
    %v91 = vsel %vm52, %v46, %v88
    %v92 = vadd.f32 %v89, 1e-06
    %v93 = vadd.f32 %v90, 1e-06
    %v94 = vadd.f32 %v91, 1e-06
    %v95 = vmul.f32 %v92, %v47
    %v96 = vmul.f32 %v93, %v48
    %v97 = vmul.f32 %v94, %v49
    %v98 = vadd.f32 %v41, %v95
    %v99 = vadd.f32 %v42, %v96
    %v100 = vadd.f32 %v43, %v97
    %v101 = vpack.c.bf16 %v40, %v40
    %v102 = vpack.c.bf16 %v99, %v98
    %v103 = vperm.slane %v100, 0
    %vm104 = vcmask 130048
    %v106 = vsel %vm104, %v101, 0
    %108 = vmatpush.bf16.msra.mxu0 0
    %109 = vmatpush.bf16.msra.mxu0 0
    %110 = vmatpush.bf16.msra.mxu0 0
    %111 = vmatpush.bf16.msra.mxu0 0
    %112 = vmatpush.bf16.msra.mxu0 0
    %113 = vmatpush.bf16.msra.mxu0 0
    %114 = vmatpush.bf16.msra.mxu0 0
    %115 = vmatpush.bf16.msra.mxu0 %v102
    %116 = vmatmul.bf16.gmra.mxu0 %v106
    %v117 = vpop.f32.mrf.mxu0
    %v118 = vadd.f32 %v103, %v117
    %v119 = vpop.f32.mrf.mxu0
    %120 = vdwg.mxu0
    %v121 = vmax.f32 %v118, 0.0
    %v122 = vmul.f32 %v98, 0.5
    %v123 = vmul.f32 %v99, 0.5
    %v124 = vmul.f32 %v100, 0.5
    %v125 = vmul.f32 %v122, %v98
    %v126 = vmul.f32 %v123, %v99
    %v127 = vmul.f32 %v124, %v100
    %v128 = vmul.f32 %v47, 0.5
    %v129 = vmul.f32 %v48, 0.5
    %v130 = vmul.f32 %v49, 0.5
    %v131 = vmul.f32 %v128, %v47
    %v132 = vmul.f32 %v129, %v48
    %v133 = vmul.f32 %v130, %v49
    %v134 = vsub.f32 %v125, %v131
    %v135 = vsub.f32 %v126, %v132
    %v136 = vsub.f32 %v127, %v133
    %v137 = vlog2.pop %v92
    %v138 = vmul.f32 %v137, 0.6931472
    %v139 = vlog2.pop %v93
    %v140 = vmul.f32 %v139, 0.6931472
    %v141 = vlog2.pop %v94
    %v142 = vmul.f32 %v141, 0.6931472
    %v143 = vsub.f32 %v134, %v138
    %v144 = vsub.f32 %v135, %v140
    %v145 = vsub.f32 %v136, %v142
    %vm146 = vcmask 261120
    %v147 = vsel %vm146, %v143, 0.0
    %v148 = vsel %vm146, %v144, 0.0
    %v149 = vadd.f32 %v147, %v148
    %vm150 = vcmask 253952
    %v151 = vsel %vm150, %v145, 0.0
    %v152 = vadd.f32 %v149, %v151
    %v153 = vrot.slane %v152, 4
    %v154 = vadd.f32 %v152, %v153
    %v155 = vrot.slane %v154, 2
    %v156 = vadd.f32 %v154, %v155
    %v157 = vrot.slane %v156, 1
    %v158 = vadd.f32 %v156, %v157
    %v159 = vld [vmem:[#allocation2] sm:$0x1]
    %v160 = vadd.f32 %v159, %v158
    %161 = vst.msk [vmem:[#allocation2] sm:$0x1] %vm150, %v160
    %v162 = vld [vmem:[%s4] sm:$0xff]
    %v163 = vld [vmem:[%s4 + $0x8] sm:$0xff]
    %v164 = vld [vmem:[%s4 + $0x10] sm:$0xff]
    %v165 = vld [vmem:[%s4 + $0x18] sm:$0xff]
    %v166 = vld [vmem:[%s4 + $0x20] sm:$0x1]
    %v167 = vld [vmem:[%s5] sm:$0xff]
    %v168 = vld [vmem:[%s5 + $0x8] sm:$0xff]
    %v169 = vld [vmem:[%s5 + $0x10] sm:$0xff]
    %v170 = vld [vmem:[%s5 + $0x18] sm:$0xff]
    %v171 = vld [vmem:[%s5 + $0x20] sm:$0x1]
    %v172 = vld [vmem:[%s6] sm:$0xff]
    %v173 = vld [vmem:[%s6 + $0x8] sm:$0xff]
    %v174 = vld [vmem:[%s6 + $0x10] sm:$0xff]
    %v175 = vld [vmem:[%s6 + $0x18] sm:$0xff]
    %v176 = vld [vmem:[%s6 + $0x20] sm:$0x1]
    %vm177 = vcmp.gt.f32.partialorder %v167, 20.0
    %vm178 = vcmp.gt.f32.partialorder %v168, 20.0
    %vm179 = vcmp.gt.f32.partialorder %v169, 20.0
    %vm180 = vcmp.gt.f32.partialorder %v170, 20.0
    %vm181 = vcmp.gt.f32.partialorder %v171, 20.0
    %v182 = vmin.f32 %v167, 20.0
    %v183 = vmin.f32 %v168, 20.0
    %v184 = vmin.f32 %v169, 20.0
    %v185 = vmin.f32 %v170, 20.0
    %v186 = vmin.f32 %v171, 20.0
    %v187 = vmul.f32 %v182, 1.442695
    %v188 = vpow.pop %v187
    %v189 = vmul.f32 %v183, 1.442695
    %v190 = vpow.pop %v189
    %v191 = vmul.f32 %v184, 1.442695
    %v192 = vpow.pop %v191
    %v193 = vmul.f32 %v185, 1.442695
    %v194 = vpow.pop %v193
    %v195 = vmul.f32 %v186, 1.442695
    %v196 = vpow.pop %v195
    %v197 = vadd.f32 %v188, 1.0
    %v198 = vlog2.pop %v197
    %v199 = vmul.f32 %v198, 0.6931472
    %v200 = vmul.f32 -0.5, %v188
    %v201 = vadd.f32 %v200, 1.0
    %v202 = vmul.f32 %v201, %v188
    %v203 = vand.u32 2147483647, %v188
    %vm204 = vcmp.lt.f32.partialorder %v203, 0.0004427343
    %v205 = vsel %vm204, %v202, %v199
    %v206 = vadd.f32 %v190, 1.0
    %v207 = vlog2.pop %v206
    %v208 = vmul.f32 %v207, 0.6931472
    %v209 = vmul.f32 -0.5, %v190
    %v210 = vadd.f32 %v209, 1.0
    %v211 = vmul.f32 %v210, %v190
    %v212 = vand.u32 2147483647, %v190
    %vm213 = vcmp.lt.f32.partialorder %v212, 0.0004427343
    %v214 = vsel %vm213, %v211, %v208
    %v215 = vadd.f32 %v192, 1.0
    %v216 = vlog2.pop %v215
    %v217 = vmul.f32 %v216, 0.6931472
    %v218 = vmul.f32 -0.5, %v192
    %v219 = vadd.f32 %v218, 1.0
    %v220 = vmul.f32 %v219, %v192
    %v221 = vand.u32 2147483647, %v192
    %vm222 = vcmp.lt.f32.partialorder %v221, 0.0004427343
    %v223 = vsel %vm222, %v220, %v217
    %v224 = vadd.f32 %v194, 1.0
    %v225 = vlog2.pop %v224
    %v226 = vmul.f32 %v225, 0.6931472
    %v227 = vmul.f32 -0.5, %v194
    %v228 = vadd.f32 %v227, 1.0
    %v229 = vmul.f32 %v228, %v194
    %v230 = vand.u32 2147483647, %v194
    %vm231 = vcmp.lt.f32.partialorder %v230, 0.0004427343
    %v232 = vsel %vm231, %v229, %v226
    %v233 = vadd.f32 %v196, 1.0
    %v234 = vlog2.pop %v233
    %v235 = vmul.f32 %v234, 0.6931472
    %v236 = vmul.f32 -0.5, %v196
    %v237 = vadd.f32 %v236, 1.0
    %v238 = vmul.f32 %v237, %v196
    %v239 = vand.u32 2147483647, %v196
    %vm240 = vcmp.lt.f32.partialorder %v239, 0.0004427343
    %v241 = vsel %vm240, %v238, %v235
    %v242 = vsel %vm177, %v167, %v205
    %v243 = vsel %vm178, %v168, %v214
    %v244 = vsel %vm179, %v169, %v223
    %v245 = vsel %vm180, %v170, %v232
    %v246 = vsel %vm181, %v171, %v241
    %v247 = vadd.f32 %v242, 1e-06
    %v248 = vadd.f32 %v243, 1e-06
    %v249 = vadd.f32 %v244, 1e-06
    %v250 = vadd.f32 %v245, 1e-06
    %v251 = vadd.f32 %v246, 1e-06
    %v252 = vmul.f32 %v247, %v172
    %v253 = vmul.f32 %v248, %v173
    %v254 = vmul.f32 %v249, %v174
    %v255 = vmul.f32 %v250, %v175
    %v256 = vmul.f32 %v251, %v176
    %v257 = vadd.f32 %v162, %v252
    %v258 = vadd.f32 %v163, %v253
    %v259 = vadd.f32 %v164, %v254
    %v260 = vadd.f32 %v165, %v255
    %v261 = vadd.f32 %v166, %v256
    %v262 = vpack.c.bf16 %v121, %v121
    %v263 = vpack.c.bf16 %v258, %v257
    %v264 = vpack.c.bf16 %v260, %v259
    %v265 = vperm.slane %v261, 0
    %v267 = vsel %vm146, %v262, 0
    %269 = vmatpush.bf16.msra.mxu0 0
    %270 = vmatpush.bf16.msra.mxu0 0
    %271 = vmatpush.bf16.msra.mxu0 0
    %272 = vmatpush.bf16.msra.mxu0 0
    %273 = vmatpush.bf16.msra.mxu0 0
    %274 = vmatpush.bf16.msra.mxu0 0
    %275 = vmatpush.bf16.msra.mxu0 %v264
    %276 = vmatpush.bf16.msra.mxu0 %v263
    %277 = vmatmul.bf16.gmra.mxu0 %v267
    %v278 = vpop.f32.mrf.mxu0
    %v279 = vadd.f32 %v265, %v278
    %v280 = vpop.f32.mrf.mxu0
    %281 = vdwg.mxu0
    %v282 = vmax.f32 %v279, 0.0
    %v283 = vmul.f32 %v257, 0.5
    %v284 = vmul.f32 %v258, 0.5
    %v285 = vmul.f32 %v259, 0.5
    %v286 = vmul.f32 %v260, 0.5
    %v287 = vmul.f32 %v261, 0.5
    %v288 = vmul.f32 %v283, %v257
    %v289 = vmul.f32 %v284, %v258
    %v290 = vmul.f32 %v285, %v259
    %v291 = vmul.f32 %v286, %v260
    %v292 = vmul.f32 %v287, %v261
    %v293 = vmul.f32 %v172, 0.5
    %v294 = vmul.f32 %v173, 0.5
    %v295 = vmul.f32 %v174, 0.5
    %v296 = vmul.f32 %v175, 0.5
    %v297 = vmul.f32 %v176, 0.5
    %v298 = vmul.f32 %v293, %v172
    %v299 = vmul.f32 %v294, %v173
    %v300 = vmul.f32 %v295, %v174
    %v301 = vmul.f32 %v296, %v175
    %v302 = vmul.f32 %v297, %v176
    %v303 = vsub.f32 %v288, %v298
    %v304 = vsub.f32 %v289, %v299
    %v305 = vsub.f32 %v290, %v300
    %v306 = vsub.f32 %v291, %v301
    %v307 = vsub.f32 %v292, %v302
    %v308 = vlog2.pop %v247
    %v309 = vmul.f32 %v308, 0.6931472
    %v310 = vlog2.pop %v248
    %v311 = vmul.f32 %v310, 0.6931472
    %v312 = vlog2.pop %v249
    %v313 = vmul.f32 %v312, 0.6931472
    %v314 = vlog2.pop %v250
    %v315 = vmul.f32 %v314, 0.6931472
    %v316 = vlog2.pop %v251
    %v317 = vmul.f32 %v316, 0.6931472
    %v318 = vsub.f32 %v303, %v309
    %v319 = vsub.f32 %v304, %v311
    %v320 = vsub.f32 %v305, %v313
    %v321 = vsub.f32 %v306, %v315
    %v322 = vsub.f32 %v307, %v317
    %v323 = vsel %vm146, %v318, 0.0
    %v324 = vsel %vm146, %v319, 0.0
    %v325 = vadd.f32 %v323, %v324
    %v326 = vsel %vm146, %v320, 0.0
    %v327 = vadd.f32 %v325, %v326
    %v328 = vsel %vm146, %v321, 0.0
    %v329 = vadd.f32 %v327, %v328
    %v330 = vsel %vm150, %v322, 0.0
    %v331 = vadd.f32 %v329, %v330
    %v332 = vrot.slane %v331, 4
    %v333 = vadd.f32 %v331, %v332
    %v334 = vrot.slane %v333, 2
    %v335 = vadd.f32 %v333, %v334
    %v336 = vrot.slane %v335, 1
    %v337 = vadd.f32 %v335, %v336
    %v338 = vld [vmem:[#allocation2] sm:$0x1]
    %v339 = vadd.f32 %v338, %v337
    %340 = vst.msk [vmem:[#allocation2] sm:$0x1] %vm150, %v339
    %v341 = vld [vmem:[%s7] sm:$0xff]
    %v342 = vld [vmem:[%s7 + $0x8] sm:$0xff]
    %v343 = vld [vmem:[%s7 + $0x10] sm:$0xff]
    %v344 = vld [vmem:[%s7 + $0x18] sm:$0xff]
    %v345 = vld [vmem:[%s7 + $0x20] sm:$0x1]
    %v346 = vld [vmem:[%s8] sm:$0xff]
    %v347 = vld [vmem:[%s8 + $0x8] sm:$0xff]
    %v348 = vld [vmem:[%s8 + $0x10] sm:$0xff]
    %v349 = vld [vmem:[%s8 + $0x18] sm:$0xff]
    %v350 = vld [vmem:[%s8 + $0x20] sm:$0x1]
    %v351 = vld [vmem:[%s9] sm:$0xff]
    %v352 = vld [vmem:[%s9 + $0x8] sm:$0xff]
    %v353 = vld [vmem:[%s9 + $0x10] sm:$0xff]
    %v354 = vld [vmem:[%s9 + $0x18] sm:$0xff]
    %v355 = vld [vmem:[%s9 + $0x20] sm:$0x1]
    %vm356 = vcmp.gt.f32.partialorder %v346, 20.0
    %vm357 = vcmp.gt.f32.partialorder %v347, 20.0
    %vm358 = vcmp.gt.f32.partialorder %v348, 20.0
    %vm359 = vcmp.gt.f32.partialorder %v349, 20.0
    %vm360 = vcmp.gt.f32.partialorder %v350, 20.0
    %v361 = vmin.f32 %v346, 20.0
    %v362 = vmin.f32 %v347, 20.0
    %v363 = vmin.f32 %v348, 20.0
    %v364 = vmin.f32 %v349, 20.0
    %v365 = vmin.f32 %v350, 20.0
    %v366 = vmul.f32 %v361, 1.442695
    %v367 = vpow.pop %v366
    %v368 = vmul.f32 %v362, 1.442695
    %v369 = vpow.pop %v368
    %v370 = vmul.f32 %v363, 1.442695
    %v371 = vpow.pop %v370
    %v372 = vmul.f32 %v364, 1.442695
    %v373 = vpow.pop %v372
    %v374 = vmul.f32 %v365, 1.442695
    %v375 = vpow.pop %v374
    %v376 = vadd.f32 %v367, 1.0
    %v377 = vlog2.pop %v376
    %v378 = vmul.f32 %v377, 0.6931472
    %v379 = vmul.f32 -0.5, %v367
    %v380 = vadd.f32 %v379, 1.0
    %v381 = vmul.f32 %v380, %v367
    %v382 = vand.u32 2147483647, %v367
    %vm383 = vcmp.lt.f32.partialorder %v382, 0.0004427343
    %v384 = vsel %vm383, %v381, %v378
    %v385 = vadd.f32 %v369, 1.0
    %v386 = vlog2.pop %v385
    %v387 = vmul.f32 %v386, 0.6931472
    %v388 = vmul.f32 -0.5, %v369
    %v389 = vadd.f32 %v388, 1.0
    %v390 = vmul.f32 %v389, %v369
    %v391 = vand.u32 2147483647, %v369
    %vm392 = vcmp.lt.f32.partialorder %v391, 0.0004427343
    %v393 = vsel %vm392, %v390, %v387
    %v394 = vadd.f32 %v371, 1.0
    %v395 = vlog2.pop %v394
    %v396 = vmul.f32 %v395, 0.6931472
    %v397 = vmul.f32 -0.5, %v371
    %v398 = vadd.f32 %v397, 1.0
    %v399 = vmul.f32 %v398, %v371
    %v400 = vand.u32 2147483647, %v371
    %vm401 = vcmp.lt.f32.partialorder %v400, 0.0004427343
    %v402 = vsel %vm401, %v399, %v396
    %v403 = vadd.f32 %v373, 1.0
    %v404 = vlog2.pop %v403
    %v405 = vmul.f32 %v404, 0.6931472
    %v406 = vmul.f32 -0.5, %v373
    %v407 = vadd.f32 %v406, 1.0
    %v408 = vmul.f32 %v407, %v373
    %v409 = vand.u32 2147483647, %v373
    %vm410 = vcmp.lt.f32.partialorder %v409, 0.0004427343
    %v411 = vsel %vm410, %v408, %v405
    %v412 = vadd.f32 %v375, 1.0
    %v413 = vlog2.pop %v412
    %v414 = vmul.f32 %v413, 0.6931472
    %v415 = vmul.f32 -0.5, %v375
    %v416 = vadd.f32 %v415, 1.0
    %v417 = vmul.f32 %v416, %v375
    %v418 = vand.u32 2147483647, %v375
    %vm419 = vcmp.lt.f32.partialorder %v418, 0.0004427343
    %v420 = vsel %vm419, %v417, %v414
    %v421 = vsel %vm356, %v346, %v384
    %v422 = vsel %vm357, %v347, %v393
    %v423 = vsel %vm358, %v348, %v402
    %v424 = vsel %vm359, %v349, %v411
    %v425 = vsel %vm360, %v350, %v420
    %v426 = vadd.f32 %v421, 1e-06
    %v427 = vadd.f32 %v422, 1e-06
    %v428 = vadd.f32 %v423, 1e-06
    %v429 = vadd.f32 %v424, 1e-06
    %v430 = vadd.f32 %v425, 1e-06
    %v431 = vmul.f32 %v426, %v351
    %v432 = vmul.f32 %v427, %v352
    %v433 = vmul.f32 %v428, %v353
    %v434 = vmul.f32 %v429, %v354
    %v435 = vmul.f32 %v430, %v355
    %v436 = vadd.f32 %v341, %v431
    %v437 = vadd.f32 %v342, %v432
    %v438 = vadd.f32 %v343, %v433
    %v439 = vadd.f32 %v344, %v434
    %v440 = vadd.f32 %v345, %v435
    %v441 = vpack.c.bf16 %v282, %v282
    %v442 = vpack.c.bf16 %v437, %v436
    %v443 = vpack.c.bf16 %v439, %v438
    %v444 = vperm.slane %v440, 0
    %v446 = vsel %vm146, %v441, 0
    %448 = vmatpush.bf16.msra.mxu0 0
    %449 = vmatpush.bf16.msra.mxu0 0
    %450 = vmatpush.bf16.msra.mxu0 0
    %451 = vmatpush.bf16.msra.mxu0 0
    %452 = vmatpush.bf16.msra.mxu0 0
    %453 = vmatpush.bf16.msra.mxu0 0
    %454 = vmatpush.bf16.msra.mxu0 %v443
    %455 = vmatpush.bf16.msra.mxu0 %v442
    %456 = vmatmul.bf16.gmra.mxu0 %v446
    %v457 = vpop.f32.mrf.mxu0
    %v458 = vadd.f32 %v444, %v457
    %v459 = vpop.f32.mrf.mxu0
    %460 = vdwg.mxu0
    %v461 = vmul.f32 %v436, 0.5
    %v462 = vmul.f32 %v437, 0.5
    %v463 = vmul.f32 %v438, 0.5
    %v464 = vmul.f32 %v439, 0.5
    %v465 = vmul.f32 %v440, 0.5
    %v466 = vmul.f32 %v461, %v436
    %v467 = vmul.f32 %v462, %v437
    %v468 = vmul.f32 %v463, %v438
    %v469 = vmul.f32 %v464, %v439
    %v470 = vmul.f32 %v465, %v440
    %v471 = vmul.f32 %v351, 0.5
    %v472 = vmul.f32 %v352, 0.5
    %v473 = vmul.f32 %v353, 0.5
    %v474 = vmul.f32 %v354, 0.5
    %v475 = vmul.f32 %v355, 0.5
    %v476 = vmul.f32 %v471, %v351
    %v477 = vmul.f32 %v472, %v352
    %v478 = vmul.f32 %v473, %v353
    %v479 = vmul.f32 %v474, %v354
    %v480 = vmul.f32 %v475, %v355
    %v481 = vsub.f32 %v466, %v476
    %v482 = vsub.f32 %v467, %v477
    %v483 = vsub.f32 %v468, %v478
    %v484 = vsub.f32 %v469, %v479
    %v485 = vsub.f32 %v470, %v480
    %v486 = vlog2.pop %v426
    %v487 = vmul.f32 %v486, 0.6931472
    %v488 = vlog2.pop %v427
    %v489 = vmul.f32 %v488, 0.6931472
    %v490 = vlog2.pop %v428
    %v491 = vmul.f32 %v490, 0.6931472
    %v492 = vlog2.pop %v429
    %v493 = vmul.f32 %v492, 0.6931472
    %v494 = vlog2.pop %v430
    %v495 = vmul.f32 %v494, 0.6931472
    %v496 = vsub.f32 %v481, %v487
    %v497 = vsub.f32 %v482, %v489
    %v498 = vsub.f32 %v483, %v491
    %v499 = vsub.f32 %v484, %v493
    %v500 = vsub.f32 %v485, %v495
    %vm501 = vcmask 64512
    %v502 = vsel %vm501, %v496, 0.0
    %v503 = vsel %vm501, %v497, 0.0
    %v504 = vadd.f32 %v502, %v503
    %v505 = vsel %vm501, %v498, 0.0
    %v506 = vadd.f32 %v504, %v505
    %v507 = vsel %vm501, %v499, 0.0
    %v508 = vadd.f32 %v506, %v507
    %vm509 = vcmask 57344
    %v510 = vsel %vm509, %v500, 0.0
    %v511 = vadd.f32 %v508, %v510
    %v512 = vrot.slane %v511, 4
    %v513 = vadd.f32 %v511, %v512
    %v514 = vrot.slane %v513, 2
    %v515 = vadd.f32 %v513, %v514
    %v516 = vrot.slane %v515, 1
    %v517 = vadd.f32 %v515, %v516
    %v518 = vld [vmem:[#allocation2] sm:$0x1]
    %v519 = vadd.f32 %v518, %v517
    %520 = vst.msk [vmem:[#allocation2] sm:$0x1] %vm509, %v519
    %521 = vst.msk [vmem:[%s10] sm:$0xff] %vm501, %v458
    %v522 = vld [vmem:[#allocation2] sm:$0x1]
    %vm523 = vcmask 1040384
    %v524 = vsel %vm523, %v522, 0.0
    %525 = vadd.xlane.f32.xlu0 %v524
    %v526 = vpop.xlane.xlu0 %525
    %v527 = vrot.slane %v526, 4
    %v528 = vadd.f32 %v526, %v527
    %v529 = vrot.slane %v528, 2
    %v530 = vadd.f32 %v528, %v529
    %v531 = vrot.slane %v530, 1
    %v532 = vadd.f32 %v530, %v531
    %s533 = vtos %v532
    %s534 = scalar_lea.smem [#allocation3], 0
    %535 = sst [smem:[%s534]] %s533
    // Predicated region
    $region42: #{forward.1} parent=1 // pred_check
      _
    $region43: #{forward.1} parent=1 // pred_check_branch
      %537 = sbr.rel (0) target = $region45
    $region44: #{forward.1} parent=1 // pred_region
      _
    $region45: #{forward.1} parent=1 // pred_fallthru
      _
    // Predicated region
    $region46: #{forward.1} parent=1 // pred_check
      _
    $region47: #{forward.1} parent=1 // pred_check_branch
      %539 = sbr.rel (0) target = $region49
    $region48: #{forward.1} parent=1 // pred_region
      %541 = vsyncadd [#allocation4], 0
      %s543 = sshll.u32 %s11, 4
      %s544 = int_to_ptr.hbm [resolvable:$true] %s543
      %546 = dma.smem_to_hbm [#allocation3], 16, %s544, [#allocation4]
    $region49: #{forward.1} parent=1 // pred_fallthru
      _
    // Predicated region
    $region50: #{forward.1} parent=1 // pred_check
      _
    $region51: #{forward.1} parent=1 // pred_check_branch
      %548 = sbr.rel (0) target = $region53
    $region52: #{forward.1} parent=1 // pred_region
      _
    $region53: #{forward.1} parent=1 // pred_fallthru
      _
    // Predicated region
    $region54: #{forward.1} parent=1 // pred_check
      _
    $region55: #{forward.1} parent=1 // pred_check_branch
      %550 = sbr.rel (0) target = $region57
    $region56: #{forward.1} parent=1 // pred_region
      %552 = dma.done [#allocation4], 16
    $region57: #{forward.1} parent=1 // pred_fallthru
      _
    %553 = sfence
    %554 = vsyncpa [#allocation4], 1

</llo_original>
